<compile_context>
chip_gen: v5e
topology: v5e:2x2
jax: 0.10.0
libtpu: 0.0.40
codegen_flags: <defaults>
</compile_context>

<pallas_src>
import math

import jax
import jax.numpy as jnp
from jax.experimental import pallas as pl
from jax.experimental.pallas import tpu as pltpu

LANES = 128
MAX_BLOCK_ROWS = 2048   # moment-update tile: 2048*128*4B = 1 MiB/stream/block


# -----------------------------------------------------------------------------
# Forward kernel: fused conv(banded matmul) + bias + ReLU + avg-pool + linear
# -----------------------------------------------------------------------------
def _swag_forward_kernel(x_ref, wb_ref, cbias_ref, pool_ref, fcw_ref, fcb_ref, out_ref):
    """One batch tile (TB samples) per grid step (grid axis 0, "parallel").

    x_ref    : [TB*(H+2), (W+2)*C]   zero-padded NHWC rows of TB samples, bf16
    wb_ref   : [3, (W+2)*C, W*Cout]  banded conv weights, one matrix per vertical tap
    cbias_ref: [1, W*Cout]           conv bias tiled along x
    pool_ref : [TB, TB*(H+2)-2]      per-sample block-averaging matrix (1/(H*W) weights)
    fcw_ref  : [W*Cout, NCP]         fc weight tiled along x
    fcb_ref  : [1, NCP]              fc bias (lane padded to NCP)
    out_ref  : [TB, NCP]             logits, one lane-dense row per sample
    """
    M = x_ref.shape[0] - 2
    # Single aligned load of the whole tile, up-cast once; the three vertical conv
    # taps are static sublane-shifted views of this f32 value.
    x = x_ref[...].astype(jnp.float32)                         # [TB*(H+2), (W+2)*C]
    acc = jnp.dot(x[0:M], wb_ref[0], preferred_element_type=jnp.float32)
    acc = acc + jnp.dot(x[1:M + 1], wb_ref[1], preferred_element_type=jnp.float32)
    acc = acc + jnp.dot(x[2:M + 2], wb_ref[2], preferred_element_type=jnp.float32)
    h = jnp.maximum(acc + cbias_ref[...], 0.0)                 # [M, W*Cout]  (VPU)
    # Global average pool as one MXU matmul; rows that straddle two samples' padding
    # carry garbage but have zero weight in the pooling matrix.
    pooled = jnp.dot(pool_ref[...], h, preferred_element_type=jnp.float32)   # [TB, W*Cout]
    logits = jnp.dot(pooled, fcw_ref[...],
                     preferred_element_type=jnp.float32) + fcb_ref[...]      # [TB, NCP]
    out_ref[...] = logits.astype(out_ref.dtype)


def swag_forward(x, params, *, batch_tile=None, activation_dtype=jnp.bfloat16):
    """x: [N, C, H, W] float32 (NCHW, like PyTorch). Returns [N, num_classes]."""
    conv_w = params["conv_w"]      # [C_out, C_in, 3, 3]  (OIHW)
    conv_b = params["conv_b"]      # [C_out]
    fc_w = params["fc_w"]          # [num_classes, C_out] (PyTorch Linear layout)
    fc_b = params["fc_b"]          # [num_classes]

    N, C, H, W = x.shape
    C_out = conv_w.shape[0]
    num_classes = fc_w.shape[0]
    NCP = -(-num_classes // LANES) * LANES        # lane-dense class padding
    WCO = W * C_out
    WCP = (W + 2) * C

    # Batch tile: TB*H >= 256 fills the v6e/v7x MXU (TB=16 for H=16); TB=8 targets
    # v5e's 128x128 MXU; tiny/ragged batches fall back to a single full-batch step.
    if batch_tile is None:
        batch_tile = next((tb for tb in (16, 8) if N >= tb and N % tb == 0), N)
    TB = batch_tile
    assert N % TB == 0, "batch_tile must divide the batch size"
    R = TB * (H + 2)
    M = R - 2

    # --- activation prep: NCHW->NHWC + zero pad only (no 9x im2col). For real image
    # sizes feed NHWC directly / pad upstream; negligible at this scale. -----------
    xnhwc = jnp.transpose(x, (0, 2, 3, 1))                       # [N, H, W, C]
    xp = jnp.pad(xnhwc, ((0, 0), (1, 1), (1, 1), (0, 0)))        # [N, H+2, W+2, C]
    x2d = xp.reshape(N * (H + 2), WCP).astype(activation_dtype)  # 2-D slab, bf16

    # --- weight prep (tiny, done once per call) --------------------------------
    # Banded block-Toeplitz matrices: wb[ky, x_in*C + c, x*C_out + co] =
    #   conv_w[co, c, ky, x_in - x]  if 0 <= x_in - x <= 2 else 0
    w_t = conv_w.transpose(2, 3, 1, 0).astype(jnp.float32)       # [ky, kx, C, C_out]
    sel = (jnp.arange(W + 2)[None, :, None] ==
           (jnp.arange(W)[None, None, :] +
            jnp.arange(3)[:, None, None])).astype(jnp.float32)   # [3, W+2, W]
    wb = jnp.einsum("kix,ykcd->yicxd", sel, w_t).reshape(3, WCP, WCO)

    cbias = jnp.tile(conv_b.astype(jnp.float32), W).reshape(1, WCO)        # [1, W*Cout]
    fc_big = jnp.tile(fc_w.T.astype(jnp.float32), (W, 1))                  # [W*Cout, ncls]
    fc_big = jnp.pad(fc_big, ((0, 0), (0, NCP - num_classes)))             # [W*Cout, NCP]
    fcb_pad = jnp.pad(fc_b.astype(jnp.float32), (0, NCP - num_classes)).reshape(1, NCP)

    # Per-sample pooling matrix over the stacked rows: row b*(H+2)+y (y < H) of the
    # pre-ReLU sum corresponds to output row y of sample b; everything else is 0.
    rel = jnp.arange(M)[None, :] - (jnp.arange(TB) * (H + 2))[:, None]     # [TB, M]
    pool = jnp.where((rel >= 0) & (rel < H), 1.0 / (H * W), 0.0).astype(jnp.float32)

    out = pl.pallas_call(
        _swag_forward_kernel,
        grid=(N // TB,),
        in_specs=[
            pl.BlockSpec((R, WCP), lambda i: (i, 0)),
            pl.BlockSpec((3, WCP, WCO), lambda i: (0, 0, 0)),
            pl.BlockSpec((1, WCO), lambda i: (0, 0)),
            pl.BlockSpec((TB, M), lambda i: (0, 0)),
            pl.BlockSpec((WCO, NCP), lambda i: (0, 0)),
            pl.BlockSpec((1, NCP), lambda i: (0, 0)),
        ],
        out_specs=pl.BlockSpec((TB, NCP), lambda i: (i, 0)),
        out_shape=jax.ShapeDtypeStruct((N, NCP), jnp.float32),
        compiler_params=pltpu.CompilerParams(dimension_semantics=("parallel",)),
    )(x2d, wb, cbias, pool, fc_big, fcb_pad)
    return out[:, :num_classes]


# -----------------------------------------------------------------------------
# SWAG moment update: single fused, grid-tiled, in-place elementwise kernel
#   mean <- mean + (p - mean)/(n+1)          (== (n*mean + p)/(n+1))
#   m2   <- m2   + (p^2 - m2)/(n+1)          (== (n*m2 + p^2)/(n+1))
# n arrives as a runtime SMEM scalar (scalar prefetch) -> one compile for all steps.
# -----------------------------------------------------------------------------
def _swag_moment_kernel(n_ref, p_ref, mean_ref, m2_ref, new_mean_ref, new_m2_ref):
    inv = 1.0 / (n_ref[0].astype(jnp.float32) + 1.0)
    p = p_ref[...]
    m = mean_ref[...]
    m2 = m2_ref[...]
    new_mean_ref[...] = m + (p - m) * inv
    new_m2_ref[...] = m2 + (p * p - m2) * inv


def _param_layout(params):
    """Packed layout. Relies on a stable params-dict insertion order across calls."""
    names = list(params.keys())
    sizes = [int(math.prod(params[k].shape)) for k in names]
    offsets, acc = [], 0
    for s in sizes:
        offsets.append(acc)
        acc += s
    total = acc
    rows = -(-total // LANES)
    block_rows = min(MAX_BLOCK_ROWS, -(-rows // 8) * 8)      # multiple of 8
    rows_padded = -(-rows // block_rows) * block_rows
    return names, sizes, offsets, total, rows_padded, block_rows


def _block_rows_for(rows_padded):
    return min(MAX_BLOCK_ROWS, rows_padded)


def swag_pack_params(params, rows_padded):
    """Pack params into the flat (rows_padded, 128) layout.

    Call once per parameter refresh (or keep/mirror the live training parameters in
    this layout) — swag_update_moments reads the packed buffer directly and never
    re-packs per step.
    """
    flat = jnp.concatenate([jnp.ravel(v).astype(jnp.float32) for v in params.values()])
    flat = jnp.pad(flat, (0, rows_padded * LANES - flat.shape[0]))
    return flat.reshape(rows_padded, LANES)


def swag_init(params):
    """Zero-initialised first/second moment state (flat [rows,128] buffers) and n=0."""
    *_, rows_padded, _ = _param_layout(params)
    mean0 = jnp.zeros((rows_padded, LANES), jnp.float32)
    m20 = jnp.zeros_like(mean0)
    return mean0, m20, jnp.array(0, jnp.int32)


def swag_update_moments(p_flat, mean_flat, m2_flat, n):
    """One SWAG moment update step on packed state. jit-able; n is a jnp int32 scalar.

    mean_flat / m2_flat are updated in place via input_output_aliases — do not reuse
    the old buffers after this call (standard donation semantics).
    """
    rows_padded, lanes = mean_flat.shape
    block_rows = _block_rows_for(rows_padded)
    assert rows_padded % block_rows == 0
    n_arr = jnp.asarray(n, dtype=jnp.int32).reshape(1)

    spec = pl.BlockSpec((block_rows, lanes), lambda i, n_ref: (i, 0))
    out_sd = jax.ShapeDtypeStruct((rows_padded, lanes), jnp.float32)
    new_mean, new_m2 = pl.pallas_call(
        _swag_moment_kernel,
        grid_spec=pltpu.PrefetchScalarGridSpec(
            num_scalar_prefetch=1,
            grid=(rows_padded // block_rows,),
            in_specs=[spec, spec, spec],
            out_specs=(spec, spec),
        ),
        out_shape=(out_sd, out_sd),
        input_output_aliases={2: 0, 3: 1},        # mean/m2 updated in place
        compiler_params=pltpu.CompilerParams(dimension_semantics=("parallel",)),
    )(n_arr, p_flat, mean_flat, m2_flat)
    return new_mean, new_m2, n + 1


def swag_unflatten(flat, params):
    """Recover the per-parameter dict view of a packed moment buffer."""
    names, sizes, offsets, *_ = _param_layout(params)
    v = flat.reshape(-1)
    return {name: v[off:off + size].reshape(params[name].shape)
            for name, size, off in zip(names, sizes, offsets)}


# TODO(synk): SWAG.sample()/load_sample() draw per-parameter Gaussian samples; this
# stochastic, non-hot-path step is left to plain JAX (jax.random) host code.


# -----------------------------------------------------------------------------
# Pure-JAX reference for the forward pass (correctness check only)
# -----------------------------------------------------------------------------
def _forward_ref(x, params):
    conv = jax.lax.conv_general_dilated(
        x, params["conv_w"], window_strides=(1, 1), padding="SAME",
        dimension_numbers=("NCHW", "OIHW", "NCHW"))
    h = jnp.maximum(conv + params["conv_b"][None, :, None, None], 0.0)
    pooled = h.mean(axis=(2, 3))
    return pooled @ params["fc_w"].T + params["fc_b"]


if __name__ == "__main__":
    key = jax.random.PRNGKey(0)
    k_x, k_cw, k_cb, k_fw, k_fb = jax.random.split(key, 5)

    N, C_in, H, W = 2, 4, 16, 16
    C_out, num_classes = 8, 10

    x = jax.random.normal(k_x, (N, C_in, H, W), dtype=jnp.float32)
    params = {
        "conv_w": 0.1 * jax.random.normal(k_cw, (C_out, C_in, 3, 3), jnp.float32),
        "conv_b": 0.1 * jax.random.normal(k_cb, (C_out,), jnp.float32),
        "fc_w": 0.1 * jax.random.normal(k_fw, (num_classes, C_out), jnp.float32),
        "fc_b": 0.1 * jax.random.normal(k_fb, (num_classes,), jnp.float32),
    }

    # Forward pass (Pallas kernel) vs pure-JAX reference (bf16 activations -> loose tol).
    logits = jax.block_until_ready(swag_forward(x, params))
    ref = _forward_ref(x, params)
    assert logits.shape == (N, num_classes)
    assert jnp.allclose(logits, ref, atol=1e-2, rtol=1e-2), "forward mismatch"

    # SWAG.__init__ equivalent: zero moments packed into flat buffers, n = 0.
    mean_flat, m2_flat, n = swag_init(params)
    p_flat = swag_pack_params(params, mean_flat.shape[0])   # pack once, reuse per step
    update = jax.jit(swag_update_moments)                   # one compile for all n

    # First SWAG moment update step (n=0): moments must equal params / params^2.
    mean_flat, m2_flat, n = update(p_flat, mean_flat, m2_flat, n)
    jax.block_until_ready(mean_flat)
    theta_mean = swag_unflatten(mean_flat, params)
    theta2_mean = swag_unflatten(m2_flat, params)
    assert jnp.allclose(theta_mean["conv_w"], params["conv_w"], atol=1e-6)
    assert jnp.allclose(theta2_mean["fc_w"], params["fc_w"] ** 2, atol=1e-6)

    # Second update with identical params: moments must be unchanged, n == 2.
    mean_flat, m2_flat, n = update(p_flat, mean_flat, m2_flat, n)
    jax.block_until_ready(mean_flat)
    theta_mean = swag_unflatten(mean_flat, params)
    assert int(n) == 2
    assert jnp.allclose(theta_mean["fc_b"], params["fc_b"], atol=1e-6)

    print("KERNEL_OK")
</pallas_src>

<mosaic_0001>
module attributes {stable_mosaic.version = 11 : i64} {
  func.func @_swag_forward_kernel(%arg0: i32, %arg1: memref<36x72xbf16, #tpu.memory_space<vmem>>, %arg2: memref<3x72x128xf32, #tpu.memory_space<vmem>>, %arg3: memref<1x128xf32, #tpu.memory_space<vmem>>, %arg4: memref<2x34xf32, #tpu.memory_space<vmem>>, %arg5: memref<128x128xf32, #tpu.memory_space<vmem>>, %arg6: memref<1x128xf32, #tpu.memory_space<vmem>>, %arg7: memref<2x128xf32, #tpu.memory_space<vmem>>) attributes {dimension_semantics = [#tpu.dimension_semantics<parallel>], iteration_bounds = array<i64: 1>, scalar_prefetch = 0 : i64, scratch_operands = 0 : i64, tpu.core_type = #tpu.core_type<tc>, window_params = [{transform_indices = @transform_0, window_bounds = array<i64: 36, 72>}, {pipeline_mode = #tpu.pipeline_mode<synchronous>, transform_indices = @transform_1, window_bounds = array<i64: 3, 72, 128>}, {pipeline_mode = #tpu.pipeline_mode<synchronous>, transform_indices = @transform_2, window_bounds = array<i64: 1, 128>}, {pipeline_mode = #tpu.pipeline_mode<synchronous>, transform_indices = @transform_3, window_bounds = array<i64: 2, 34>}, {pipeline_mode = #tpu.pipeline_mode<synchronous>, transform_indices = @transform_4, window_bounds = array<i64: 128, 128>}, {pipeline_mode = #tpu.pipeline_mode<synchronous>, transform_indices = @transform_5, window_bounds = array<i64: 1, 128>}, {transform_indices = @transform_6, window_bounds = array<i64: 2, 128>}]} {
    %c0 = arith.constant 0 : index
    %c0_0 = arith.constant 0 : index
    %0 = vector.load %arg1[%c0, %c0_0] : memref<36x72xbf16, #tpu.memory_space<vmem>>, vector<36x72xbf16>
    %1 = arith.extf %0 : vector<36x72xbf16> to vector<36x72xf32>
    %2 = vector.extract_strided_slice %1 {offsets = [0, 0], sizes = [34, 72], strides = [1, 1]} : vector<36x72xf32> to vector<34x72xf32>
    %c0_1 = arith.constant 0 : index
    %c0_2 = arith.constant 0 : index
    %c0_3 = arith.constant 0 : index
    %3 = vector.load %arg2[%c0_1, %c0_2, %c0_3] : memref<3x72x128xf32, #tpu.memory_space<vmem>>, vector<1x72x128xf32>
    %4 = vector.shape_cast %3 : vector<1x72x128xf32> to vector<72x128xf32>
    %cst = arith.constant dense<0.000000e+00> : vector<34x128xf32>
    %5 = tpu.matmul %2, %4, %cst {dimension_numbers = #tpu.dot_dimension_numbers<[1], [0], [0], [1], [0, 0, 1, 1], [], []>} : vector<34x72xf32>, vector<72x128xf32>, vector<34x128xf32> -> vector<34x128xf32>
    %6 = vector.extract_strided_slice %1 {offsets = [1, 0], sizes = [34, 72], strides = [1, 1]} : vector<36x72xf32> to vector<34x72xf32>
    %c1 = arith.constant 1 : index
    %c0_4 = arith.constant 0 : index
    %c0_5 = arith.constant 0 : index
    %7 = vector.load %arg2[%c1, %c0_4, %c0_5] : memref<3x72x128xf32, #tpu.memory_space<vmem>>, vector<1x72x128xf32>
    %8 = vector.shape_cast %7 : vector<1x72x128xf32> to vector<72x128xf32>
    %cst_6 = arith.constant dense<0.000000e+00> : vector<34x128xf32>
    %9 = tpu.matmul %6, %8, %cst_6 {dimension_numbers = #tpu.dot_dimension_numbers<[1], [0], [0], [1], [0, 0, 1, 1], [], []>} : vector<34x72xf32>, vector<72x128xf32>, vector<34x128xf32> -> vector<34x128xf32>
    %10 = arith.addf %5, %9 : vector<34x128xf32>
    %11 = vector.extract_strided_slice %1 {offsets = [2, 0], sizes = [34, 72], strides = [1, 1]} : vector<36x72xf32> to vector<34x72xf32>
    %c2 = arith.constant 2 : index
    %c0_7 = arith.constant 0 : index
    %c0_8 = arith.constant 0 : index
    %12 = vector.load %arg2[%c2, %c0_7, %c0_8] : memref<3x72x128xf32, #tpu.memory_space<vmem>>, vector<1x72x128xf32>
    %13 = vector.shape_cast %12 : vector<1x72x128xf32> to vector<72x128xf32>
    %cst_9 = arith.constant dense<0.000000e+00> : vector<34x128xf32>
    %14 = tpu.matmul %11, %13, %cst_9 {dimension_numbers = #tpu.dot_dimension_numbers<[1], [0], [0], [1], [0, 0, 1, 1], [], []>} : vector<34x72xf32>, vector<72x128xf32>, vector<34x128xf32> -> vector<34x128xf32>
    %15 = arith.addf %10, %14 : vector<34x128xf32>
    %c0_10 = arith.constant 0 : index
    %c0_11 = arith.constant 0 : index
    %16 = vector.load %arg3[%c0_10, %c0_11] : memref<1x128xf32, #tpu.memory_space<vmem>>, vector<1x128xf32>
    %17 = vector.broadcast %16 : vector<1x128xf32> to vector<34x128xf32>
    %18 = arith.addf %15, %17 : vector<34x128xf32>
    %cst_12 = arith.constant 0.000000e+00 : f32
    %19 = vector.broadcast %cst_12 : f32 to vector<34x128xf32>
    %20 = arith.maximumf %18, %19 : vector<34x128xf32>
    %c0_13 = arith.constant 0 : index
    %c0_14 = arith.constant 0 : index
    %21 = vector.load %arg4[%c0_13, %c0_14] : memref<2x34xf32, #tpu.memory_space<vmem>>, vector<2x34xf32>
    %cst_15 = arith.constant dense<0.000000e+00> : vector<2x128xf32>
    %22 = tpu.matmul %21, %20, %cst_15 {dimension_numbers = #tpu.dot_dimension_numbers<[1], [0], [0], [1], [0, 0, 1, 1], [], []>} : vector<2x34xf32>, vector<34x128xf32>, vector<2x128xf32> -> vector<2x128xf32>
    %c0_16 = arith.constant 0 : index
    %c0_17 = arith.constant 0 : index
    %23 = vector.load %arg5[%c0_16, %c0_17] : memref<128x128xf32, #tpu.memory_space<vmem>>, vector<128x128xf32>
    %cst_18 = arith.constant dense<0.000000e+00> : vector<2x128xf32>
    %24 = tpu.matmul %22, %23, %cst_18 {dimension_numbers = #tpu.dot_dimension_numbers<[1], [0], [0], [1], [0, 0, 1, 1], [], []>} : vector<2x128xf32>, vector<128x128xf32>, vector<2x128xf32> -> vector<2x128xf32>
    %c0_19 = arith.constant 0 : index
    %c0_20 = arith.constant 0 : index
    %25 = vector.load %arg6[%c0_19, %c0_20] : memref<1x128xf32, #tpu.memory_space<vmem>>, vector<1x128xf32>
    %26 = vector.broadcast %25 : vector<1x128xf32> to vector<2x128xf32>
    %27 = arith.addf %24, %26 : vector<2x128xf32>
    %c0_21 = arith.constant 0 : index
    %c0_22 = arith.constant 0 : index
    %28 = vector.load %arg7[%c0_21, %c0_22] : memref<2x128xf32, #tpu.memory_space<vmem>>, vector<2x128xf32>
    tpu.vector_store %arg7[%c0_21, %c0_22], %27 {strides = array<i32>} : memref<2x128xf32, #tpu.memory_space<vmem>>, vector<2x128xf32>,
    return
  }
  func.func @transform_0(%arg0: i32) -> (i32, i32) {
    %c0_i32 = arith.constant 0 : i32
    %c0_i32_0 = arith.constant 0 : i32
    return %arg0, %c0_i32 : i32, i32
  }
  func.func @transform_1(%arg0: i32) -> (i32, i32, i32) {
    %c0_i32 = arith.constant 0 : i32
    %c0_i32_0 = arith.constant 0 : i32
    %c0_i32_1 = arith.constant 0 : i32
    %c0_i32_2 = arith.constant 0 : i32
    return %c0_i32, %c0_i32_0, %c0_i32_1 : i32, i32, i32
  }
  func.func @transform_2(%arg0: i32) -> (i32, i32) {
    %c0_i32 = arith.constant 0 : i32
    %c0_i32_0 = arith.constant 0 : i32
    %c0_i32_1 = arith.constant 0 : i32
    return %c0_i32, %c0_i32_0 : i32, i32
  }
  func.func @transform_3(%arg0: i32) -> (i32, i32) {
    %c0_i32 = arith.constant 0 : i32
    %c0_i32_0 = arith.constant 0 : i32
    %c0_i32_1 = arith.constant 0 : i32
    return %c0_i32, %c0_i32_0 : i32, i32
  }
  func.func @transform_4(%arg0: i32) -> (i32, i32) {
    %c0_i32 = arith.constant 0 : i32
    %c0_i32_0 = arith.constant 0 : i32
    %c0_i32_1 = arith.constant 0 : i32
    return %c0_i32, %c0_i32_0 : i32, i32
  }
  func.func @transform_5(%arg0: i32) -> (i32, i32) {
    %c0_i32 = arith.constant 0 : i32
    %c0_i32_0 = arith.constant 0 : i32
    %c0_i32_1 = arith.constant 0 : i32
    return %c0_i32, %c0_i32_0 : i32, i32
  }
  func.func @transform_6(%arg0: i32) -> (i32, i32) {
    %c0_i32 = arith.constant 0 : i32
    %c0_i32_0 = arith.constant 0 : i32
    return %arg0, %c0_i32 : i32, i32
  }
}

</mosaic_0001>

<llo_original>
// kernel: tpu_custom_call.1
$region0: #{tpu_custom_call.1}
  #allocation0 [shape = 'u32[]', space=smem, size = 0x4, offset = 0x4, fixed_abs, tag = 'smem constant byte address 0x4 - core index']
  #allocation1 [shape = 'u32[72,128]{1,0:T(1,128)}', space=vmem, size = 0x9000, scoped, tag = 'internal scratch']
  %s0 = inlined_call_operand.hbm [shape: bf16[36,72], index: 0, kind: input, shape index: {}]
  %s1 = inlined_call_operand.hbm [shape: f32[3,72,128], index: 1, kind: input, shape index: {}]
  %s2 = inlined_call_operand.hbm [shape: f32[1,128], index: 2, kind: input, shape index: {}]
  %s3 = inlined_call_operand.vmem [shape: f32[2,34], index: 3, kind: input, shape index: {}]
  %s4 = inlined_call_operand.hbm [shape: f32[128,128], index: 4, kind: input, shape index: {}]
  %s5 = inlined_call_operand.vmem [shape: f32[1,128], index: 5, kind: input, shape index: {}]
  %s6 = inlined_call_operand.hbm [shape: f32[2,128], index: 6, kind: output, shape index: {}]
  %s7 = sld [smem:[#allocation0]]
  $region50: #{tpu_custom_call.1} parent=0
    _
  %s9 = ssub.s32 1, %s7
  %s10 = scalar_select 0, %s9, %s7
  $region1: #{tpu_custom_call.1} parent=0
    #allocation2 [shape = 'u8[10240]{0}', space=vmem, size = 0x2800, scoped, tag = 'input window, operand 0, single buffered']
    #allocation3 [shape = 's32[1]{0}', space=sflag, size = 0x4, scoped, tag = 'scoped memory for tpu_custom_call.1']
    #allocation4 [shape = 's32[1]{0}', space=sflag, size = 0x4, scoped, tag = 'scoped memory for tpu_custom_call.1']
    #allocation5 [shape = 'u8[110592]{0}', space=vmem, size = 0x1b000, scoped, tag = 'input window, operand 1, single buffered']
    #allocation6 [shape = 's32[1]{0}', space=sflag, size = 0x4, scoped, tag = 'scoped memory for tpu_custom_call.1']
    #allocation7 [shape = 'u8[512]{0}', space=vmem, size = 0x400, scoped, tag = 'input window, operand 2, single buffered']
    #allocation8 [shape = 'u8[65536]{0}', space=vmem, size = 0x10000, scoped, tag = 'input window, operand 4, single buffered']
    #allocation9 [shape = 's32[1]{0}', space=sflag, size = 0x4, scoped, tag = 'scoped memory for tpu_custom_call.1']
    #allocation10 [shape = 'u8[1024]{0}', space=vmem, size = 0x400, scoped, tag = 'output window, operand 0, single buffered']
    %11 = vsyncpa [#allocation3], 0
    %12 = vsyncpa [#allocation6], 0
    %13 = vsyncpa [#allocation9], 0
    %14 = vsyncpa [#allocation4], 0
    // Predicated region
    $region2: #{tpu_custom_call.1} parent=1 // pred_check
      _
    $region3: #{tpu_custom_call.1} parent=1 // pred_check_branch
      %16 = sbr.rel (0) target = $region5
    $region4: #{tpu_custom_call.1} parent=1 // pred_region
      %18 = vsyncadd [#allocation3], 0
      %s19 = sshll.u32 %s0, 4
      %s20 = int_to_ptr.hbm [resolvable:$true] %s19
      %s21 = sshll.u32 [#allocation2], 4
      %s22 = int_to_ptr.vmem [resolvable:$true] %s21
      %27 = dma.hbm_to_vmem [thread:$0]  %s20, 320, %s22, [#allocation3], 64, 64, 4
    $region5: #{tpu_custom_call.1} parent=1 // pred_fallthru
      _
    // Predicated region
    $region6: #{tpu_custom_call.1} parent=1 // pred_check
      _
    $region7: #{tpu_custom_call.1} parent=1 // pred_check_branch
      %29 = sbr.rel (0) target = $region9
    $region8: #{tpu_custom_call.1} parent=1 // pred_region
      %31 = vsyncadd [#allocation6], 0
      %s32 = sshll.u32 %s1, 4
      %s33 = int_to_ptr.hbm [resolvable:$true] %s32
      %s34 = sshll.u32 [#allocation5], 4
      %s35 = int_to_ptr.vmem [resolvable:$true] %s34
      %40 = dma.hbm_to_vmem [thread:$0]  %s33, 3456, %s35, [#allocation6], 128, 128, 8
    $region9: #{tpu_custom_call.1} parent=1 // pred_fallthru
      _
    // Predicated region
    $region10: #{tpu_custom_call.1} parent=1 // pred_check
      _
    $region11: #{tpu_custom_call.1} parent=1 // pred_check_branch
      %42 = sbr.rel (0) target = $region13
    $region12: #{tpu_custom_call.1} parent=1 // pred_region
      %44 = vsyncadd [#allocation6], 0
      %s46 = sshll.u32 %s2, 4
      %s47 = int_to_ptr.hbm [resolvable:$true] %s46
      %s48 = sshll.u32 [#allocation7], 4
      %s49 = int_to_ptr.vmem [resolvable:$true] %s48
      %51 = dma.hbm_to_vmem [thread:$0]  %s47, 16, %s49, [#allocation6]
    $region13: #{tpu_custom_call.1} parent=1 // pred_fallthru
      _
    // Predicated region
    $region14: #{tpu_custom_call.1} parent=1 // pred_check
      _
    $region15: #{tpu_custom_call.1} parent=1 // pred_check_branch
      %53 = sbr.rel (0) target = $region17
    $region16: #{tpu_custom_call.1} parent=1 // pred_region
      _
    $region17: #{tpu_custom_call.1} parent=1 // pred_fallthru
      _
    // Predicated region
    $region18: #{tpu_custom_call.1} parent=1 // pred_check
      _
    $region19: #{tpu_custom_call.1} parent=1 // pred_check_branch
      %55 = sbr.rel (0) target = $region21
    $region20: #{tpu_custom_call.1} parent=1 // pred_region
      %57 = vsyncadd [#allocation9], 0
      %s58 = sshll.u32 %s4, 4
      %s59 = int_to_ptr.hbm [resolvable:$true] %s58
      %s60 = sshll.u32 [#allocation8], 4
      %s61 = int_to_ptr.vmem [resolvable:$true] %s60
      %66 = dma.hbm_to_vmem [thread:$0]  %s59, 2048, %s61, [#allocation9], 128, 128, 8
    $region21: #{tpu_custom_call.1} parent=1 // pred_fallthru
      _
    // Predicated region
    $region22: #{tpu_custom_call.1} parent=1 // pred_check
      _
    $region23: #{tpu_custom_call.1} parent=1 // pred_check_branch
      %68 = sbr.rel (0) target = $region25
    $region24: #{tpu_custom_call.1} parent=1 // pred_region
      _
    $region25: #{tpu_custom_call.1} parent=1 // pred_fallthru
      _
    // Predicated region
    $region26: #{tpu_custom_call.1} parent=1 // pred_check
      _
    $region27: #{tpu_custom_call.1} parent=1 // pred_check_branch
      %70 = sbr.rel (0) target = $region29
    $region28: #{tpu_custom_call.1} parent=1 // pred_region
      %72 = dma.done [#allocation3], 320
    $region29: #{tpu_custom_call.1} parent=1 // pred_fallthru
      _
    // Predicated region
    $region30: #{tpu_custom_call.1} parent=1 // pred_check
      _
    $region31: #{tpu_custom_call.1} parent=1 // pred_check_branch
      %74 = sbr.rel (0) target = $region33
    $region32: #{tpu_custom_call.1} parent=1 // pred_region
      %76 = dma.done [#allocation6], 3456
    $region33: #{tpu_custom_call.1} parent=1 // pred_fallthru
      _
    // Predicated region
    $region34: #{tpu_custom_call.1} parent=1 // pred_check
      _
    $region35: #{tpu_custom_call.1} parent=1 // pred_check_branch
      %78 = sbr.rel (0) target = $region37
    $region36: #{tpu_custom_call.1} parent=1 // pred_region
      %80 = dma.done [#allocation6], 16
    $region37: #{tpu_custom_call.1} parent=1 // pred_fallthru
      _
    // Predicated region
    $region38: #{tpu_custom_call.1} parent=1 // pred_check
      _
    $region39: #{tpu_custom_call.1} parent=1 // pred_check_branch
      %82 = sbr.rel (0) target = $region41
    $region40: #{tpu_custom_call.1} parent=1 // pred_region
      %84 = dma.done [#allocation9], 2048
    $region41: #{tpu_custom_call.1} parent=1 // pred_fallthru
      _
    %v85 = vld [vmem:[#allocation2] sm:$0xf]
    %v86 = vld [vmem:[#allocation2 + $0x4] sm:$0xf]
    %v87 = vld [vmem:[#allocation2 + $0x8] sm:$0xf]
    %v88 = vld [vmem:[#allocation2 + $0xc] sm:$0xf]
    %v89 = vld [vmem:[#allocation2 + $0x10] sm:$0x3]
    %v90 = vunpack.c.l.bf16 %v85
    %v91 = vunpack.c.l.bf16 %v86
    %v92 = vunpack.c.l.bf16 %v87
    %v93 = vunpack.c.l.bf16 %v88
    %v94 = vunpack.c.l.bf16 %v89
    %v95 = vld [vmem:[#allocation5] sm:$0xff]
    %v96 = vld [vmem:[#allocation5 + $0x8] sm:$0xff]
    %v97 = vld [vmem:[#allocation5 + $0x10] sm:$0xff]
    %v98 = vld [vmem:[#allocation5 + $0x18] sm:$0xff]
    %v99 = vld [vmem:[#allocation5 + $0x20] sm:$0xff]
    %v100 = vld [vmem:[#allocation5 + $0x28] sm:$0xff]
    %v101 = vld [vmem:[#allocation5 + $0x30] sm:$0xff]
    %v102 = vld [vmem:[#allocation5 + $0x38] sm:$0xff]
    %v103 = vld [vmem:[#allocation5 + $0x40] sm:$0xff]
    %s104 = scalar_lea.vmem [#allocation5], 72
    %v105 = vld [vmem:[%s104] sm:$0xff]
    %v106 = vld [vmem:[%s104 + $0x8] sm:$0xff]
    %v107 = vld [vmem:[%s104 + $0x10] sm:$0xff]
    %v108 = vld [vmem:[%s104 + $0x18] sm:$0xff]
    %v109 = vld [vmem:[%s104 + $0x20] sm:$0xff]
    %v110 = vld [vmem:[%s104 + $0x28] sm:$0xff]
    %v111 = vld [vmem:[%s104 + $0x30] sm:$0xff]
    %v112 = vld [vmem:[%s104 + $0x38] sm:$0xff]
    %v113 = vld [vmem:[%s104 + $0x40] sm:$0xff]
    %vm119 = vcmask 1046528
    %v120 = vrot.slane %v90, 1
    %v121 = vrot.slane %v91, 1
    %v122 = vsel %vm119, %v120, %v121
    %v123 = vrot.slane %v92, 1
    %v124 = vsel %vm119, %v121, %v123
    %v125 = vrot.slane %v93, 1
    %v126 = vsel %vm119, %v123, %v125
    %v127 = vrot.slane %v94, 1
    %v128 = vsel %vm119, %v125, %v127
    %vm129 = vcmask 588800
    %v130 = vsel %vm129, %v122, 0
    %v132 = vsel %vm129, %v124, 0
    %v134 = vsel %vm129, %v126, 0
    %v136 = vsel %vm129, %v128, 0
    %v138 = vsel %vm129, %v127, 0
    %140 = vmatpush.msra.mxu0 0.0
    %141 = vmatpush.msra.mxu0 0.0
    %142 = vmatpush.msra.mxu0 0.0
    %143 = vmatpush.msra.mxu0 0.0
    %144 = vmatpush.msra.mxu0 0.0
    %145 = vmatpush.msra.mxu0 0.0
    %146 = vmatpush.msra.mxu0 0.0
    %147 = vmatpush.msra.mxu0 %v113
    %148 = vmatpush.msra.mxu0 %v112
    %149 = vmatpush.msra.mxu0 %v111
    %150 = vmatpush.msra.mxu0 %v110
    %151 = vmatpush.msra.mxu0 %v109
    %152 = vmatpush.msra.mxu0 %v108
    %153 = vmatpush.msra.mxu0 %v107
    %154 = vmatpush.msra.mxu0 %v106
    %155 = vmatpush.msra.mxu0 %v105
    %156 = vmatmul.f32.gmra.mxu0 %v130
    %v157 = vpop.f32.mrf.mxu0
    %v158 = vadd.f32 0.0, %v157
    %159 = vmatmul.f32.gmra.mxu0 %v132
    %v160 = vpop.f32.mrf.mxu0
    %v161 = vadd.f32 0.0, %v160
    %162 = vmatmul.f32.gmra.mxu0 %v134
    %v163 = vpop.f32.mrf.mxu0
    %v164 = vadd.f32 0.0, %v163
    %165 = vmatmul.f32.gmra.mxu0 %v136
    %v166 = vpop.f32.mrf.mxu0
    %v167 = vadd.f32 0.0, %v166
    %168 = vmatmul.f32.gmra.mxu0 %v138
    %v169 = vpop.f32.mrf.mxu0
    %v170 = vadd.f32 0.0, %v169
    %171 = vdwg.mxu0
    %v172 = vsel %vm129, %v90, 0
    %v174 = vsel %vm129, %v91, 0
    %v176 = vsel %vm129, %v92, 0
    %v178 = vsel %vm129, %v93, 0
    %v180 = vsel %vm129, %v94, 0
    %182 = vmatpush.msra.mxu0 0.0
    %183 = vmatpush.msra.mxu0 0.0
    %184 = vmatpush.msra.mxu0 0.0
    %185 = vmatpush.msra.mxu0 0.0
    %186 = vmatpush.msra.mxu0 0.0
    %187 = vmatpush.msra.mxu0 0.0
    %188 = vmatpush.msra.mxu0 0.0
    %189 = vmatpush.msra.mxu0 %v103
    %190 = vmatpush.msra.mxu0 %v102
    %191 = vmatpush.msra.mxu0 %v101
    %192 = vmatpush.msra.mxu0 %v100
    %193 = vmatpush.msra.mxu0 %v99
    %194 = vmatpush.msra.mxu0 %v98
    %195 = vmatpush.msra.mxu0 %v97
    %196 = vmatpush.msra.mxu0 %v96
    %197 = vmatpush.msra.mxu0 %v95
    %198 = vmatmul.f32.gmra.mxu0 %v172
    %v199 = vpop.f32.mrf.mxu0
    %v200 = vadd.f32 %v158, %v199
    %201 = vmatmul.f32.gmra.mxu0 %v174
    %v202 = vpop.f32.mrf.mxu0
    %v203 = vadd.f32 %v161, %v202
    %204 = vmatmul.f32.gmra.mxu0 %v176
    %v205 = vpop.f32.mrf.mxu0
    %v206 = vadd.f32 %v164, %v205
    %207 = vmatmul.f32.gmra.mxu0 %v178
    %v208 = vpop.f32.mrf.mxu0
    %v209 = vadd.f32 %v167, %v208
    %210 = vmatmul.f32.gmra.mxu0 %v180
    %v211 = vpop.f32.mrf.mxu0
    %v212 = vadd.f32 %v170, %v211
    %213 = vdwg.mxu0
    %s214 = scalar_lea.vmem [#allocation5], 144
    %v215 = vld [vmem:[%s214] sm:$0xff]
    %v216 = vld [vmem:[%s214 + $0x8] sm:$0xff]
    %v217 = vld [vmem:[%s214 + $0x10] sm:$0xff]
    %v218 = vld [vmem:[%s214 + $0x18] sm:$0xff]
    %v219 = vld [vmem:[%s214 + $0x20] sm:$0xff]
    %v220 = vld [vmem:[%s214 + $0x28] sm:$0xff]
    %v221 = vld [vmem:[%s214 + $0x30] sm:$0xff]
    %v222 = vld [vmem:[%s214 + $0x38] sm:$0xff]
    %v223 = vld [vmem:[%s214 + $0x40] sm:$0xff]
    %vm224 = vcmask 1045504
    %v225 = vrot.slane %v90, 2
    %v226 = vrot.slane %v91, 2
    %v227 = vsel %vm224, %v225, %v226
    %v228 = vrot.slane %v92, 2
    %v229 = vsel %vm224, %v226, %v228
    %v230 = vrot.slane %v93, 2
    %v231 = vsel %vm224, %v228, %v230
    %v232 = vrot.slane %v94, 2
    %v233 = vsel %vm224, %v230, %v232
    %v234 = vsel %vm129, %v227, 0
    %v236 = vsel %vm129, %v229, 0
    %v238 = vsel %vm129, %v231, 0
    %v240 = vsel %vm129, %v233, 0
    %v242 = vsel %vm129, %v232, 0
    %244 = vmatpush.msra.mxu0 0.0
    %245 = vmatpush.msra.mxu0 0.0
    %246 = vmatpush.msra.mxu0 0.0
    %247 = vmatpush.msra.mxu0 0.0
    %248 = vmatpush.msra.mxu0 0.0
    %249 = vmatpush.msra.mxu0 0.0
    %250 = vmatpush.msra.mxu0 0.0
    %251 = vmatpush.msra.mxu0 %v223
    %252 = vmatpush.msra.mxu0 %v222
    %253 = vmatpush.msra.mxu0 %v221
    %254 = vmatpush.msra.mxu0 %v220
    %255 = vmatpush.msra.mxu0 %v219
    %256 = vmatpush.msra.mxu0 %v218
    %257 = vmatpush.msra.mxu0 %v217
    %258 = vmatpush.msra.mxu0 %v216
    %259 = vmatpush.msra.mxu0 %v215
    %260 = vmatmul.f32.gmra.mxu0 %v234
    %v261 = vpop.f32.mrf.mxu0
    %v262 = vadd.f32 0.0, %v261
    %263 = vmatmul.f32.gmra.mxu0 %v236
    %v264 = vpop.f32.mrf.mxu0
    %v265 = vadd.f32 0.0, %v264
    %266 = vmatmul.f32.gmra.mxu0 %v238
    %v267 = vpop.f32.mrf.mxu0
    %v268 = vadd.f32 0.0, %v267
    %269 = vmatmul.f32.gmra.mxu0 %v240
    %v270 = vpop.f32.mrf.mxu0
    %v271 = vadd.f32 0.0, %v270
    %272 = vmatmul.f32.gmra.mxu0 %v242
    %v273 = vpop.f32.mrf.mxu0
    %v274 = vadd.f32 0.0, %v273
    %275 = vdwg.mxu0
    %v276 = vadd.f32 %v200, %v262
    %v277 = vadd.f32 %v203, %v265
    %v278 = vadd.f32 %v206, %v268
    %v279 = vadd.f32 %v209, %v271
    %v280 = vadd.f32 %v212, %v274
    %v281 = vld [vmem:[#allocation7] sm:$0x1]
    %v283 = vperm.slane %v281, 0
    %v285 = vadd.f32 %v276, %v283
    %v286 = vadd.f32 %v277, %v283
    %v287 = vadd.f32 %v278, %v283
    %v288 = vadd.f32 %v279, %v283
    %v289 = vadd.f32 %v280, %v283
    %v290 = vmax.f32 %v285, 0.0
    %v291 = vmax.f32 %v286, 0.0
    %v292 = vmax.f32 %v287, 0.0
    %v293 = vmax.f32 %v288, 0.0
    %v294 = vmax.f32 %v289, 0.0
    %v295 = vld [vmem:[%s3] sm:$0x3]
    %vm296 = vcmask 277504
    %v298 = vsel %vm296, %v295, 0
    %vm300 = vcmask 1041408
    %v302 = vsel %vm300, %v294, 0
    %304 = vmatpush.msra.mxu0 0.0
    %305 = vmatpush.msra.mxu0 0.0
    %306 = vmatpush.msra.mxu0 0.0
    %307 = vmatpush.msra.mxu0 0.0
    %308 = vmatpush.msra.mxu0 0.0
    %309 = vmatpush.msra.mxu0 0.0
    %310 = vmatpush.msra.mxu0 0.0
    %311 = vmatpush.msra.mxu0 0.0
    %312 = vmatpush.msra.mxu0 0.0
    %313 = vmatpush.msra.mxu0 0.0
    %314 = vmatpush.msra.mxu0 0.0
    %315 = vmatpush.msra.mxu0 %v302
    %316 = vmatpush.msra.mxu0 %v293
    %317 = vmatpush.msra.mxu0 %v292
    %318 = vmatpush.msra.mxu0 %v291
    %319 = vmatpush.msra.mxu0 %v290
    %320 = vmatmul.f32.gmra.mxu0 %v298
    %v321 = vpop.f32.mrf.mxu0
    %v322 = vadd.f32 0.0, %v321
    %323 = vdwg.mxu0
    %v324 = vld [vmem:[#allocation8] sm:$0xff]
    %v325 = vld [vmem:[#allocation8 + $0x8] sm:$0xff]
    %v326 = vld [vmem:[#allocation8 + $0x10] sm:$0xff]
    %v327 = vld [vmem:[#allocation8 + $0x18] sm:$0xff]
    %v328 = vld [vmem:[#allocation8 + $0x20] sm:$0xff]
    %v329 = vld [vmem:[#allocation8 + $0x28] sm:$0xff]
    %v330 = vld [vmem:[#allocation8 + $0x30] sm:$0xff]
    %v331 = vld [vmem:[#allocation8 + $0x38] sm:$0xff]
    %v332 = vld [vmem:[#allocation8 + $0x40] sm:$0xff]
    %v333 = vld [vmem:[#allocation8 + $0x48] sm:$0xff]
    %v334 = vld [vmem:[#allocation8 + $0x50] sm:$0xff]
    %v335 = vld [vmem:[#allocation8 + $0x58] sm:$0xff]
    %v336 = vld [vmem:[#allocation8 + $0x60] sm:$0xff]
    %v337 = vld [vmem:[#allocation8 + $0x68] sm:$0xff]
    %v338 = vld [vmem:[#allocation8 + $0x70] sm:$0xff]
    %v339 = vld [vmem:[#allocation8 + $0x78] sm:$0xff]
    %v340 = vld [vmem:[%s5] sm:$0x1]
    %v342 = vperm.slane %v340, 0
    %344 = vmatpush.msra.mxu0 %v339
    %345 = vmatpush.msra.mxu0 %v338
    %346 = vmatpush.msra.mxu0 %v337
    %347 = vmatpush.msra.mxu0 %v336
    %348 = vmatpush.msra.mxu0 %v335
    %349 = vmatpush.msra.mxu0 %v334
    %350 = vmatpush.msra.mxu0 %v333
    %351 = vmatpush.msra.mxu0 %v332
    %352 = vmatpush.msra.mxu0 %v331
    %353 = vmatpush.msra.mxu0 %v330
    %354 = vmatpush.msra.mxu0 %v329
    %355 = vmatpush.msra.mxu0 %v328
    %356 = vmatpush.msra.mxu0 %v327
    %357 = vmatpush.msra.mxu0 %v326
    %358 = vmatpush.msra.mxu0 %v325
    %359 = vmatpush.msra.mxu0 %v324
    %360 = vmatmul.f32.gmra.mxu0 %v322
    %v361 = vpop.f32.mrf.mxu0
    %v362 = vadd.f32 %v342, %v361
    %363 = vdwg.mxu0
    %364 = vst [vmem:[#allocation10] sm:$0x3] %v362
    // Predicated region
    $region42: #{tpu_custom_call.1} parent=1 // pred_check
      _
    $region43: #{tpu_custom_call.1} parent=1 // pred_check_branch
      %366 = sbr.rel (0) target = $region45
    $region44: #{tpu_custom_call.1} parent=1 // pred_region
      %368 = vsyncadd [#allocation4], 0
      %s370 = sshll.u32 [#allocation10], 4
      %s371 = int_to_ptr.vmem [resolvable:$true] %s370
      %s372 = sshll.u32 %s6, 4
      %s373 = int_to_ptr.hbm [resolvable:$true] %s372
      %375 = dma.vmem_to_hbm [thread:$0]  %s371, 32, %s373, [#allocation4]
    $region45: #{tpu_custom_call.1} parent=1 // pred_fallthru
      _
    // Predicated region
    $region46: #{tpu_custom_call.1} parent=1 // pred_check
      _
    $region47: #{tpu_custom_call.1} parent=1 // pred_check_branch
      %377 = sbr.rel (0) target = $region49
    $region48: #{tpu_custom_call.1} parent=1 // pred_region
      %379 = dma.done [#allocation4], 32
    $region49: #{tpu_custom_call.1} parent=1 // pred_fallthru
      _
    %380 = vsyncpa [#allocation3], 1
    %381 = vsyncpa [#allocation6], 1
    %382 = vsyncpa [#allocation9], 1
    %383 = vsyncpa [#allocation4], 1

</llo_original>
